<compile_context>
chip_gen: v7x
topology: tpu7x:2x2x1
jax: 0.10.0
libtpu: 0.0.40
codegen_flags: <defaults>
</compile_context>

<pallas_src>
import functools
import math

import jax
import jax.numpy as jnp
from jax.experimental import pallas as pl
from jax.experimental.pallas import tpu as pltpu

_LANE = 128


def _aff_kernel(alpha_ref, beta_ref, x_ref, o_ref):
    # x_ref: (tile_rows, W) tile; alpha/beta: (1, W), VPU-broadcast over rows.
    x = x_ref[...].astype(jnp.float32)
    a = alpha_ref[...].astype(jnp.float32)
    b = beta_ref[...].astype(jnp.float32)
    o_ref[...] = (x * a + b).astype(o_ref.dtype)


def _sublane(dtype):
    # Packed-sublane multiple: 8 for 4-byte, 16 for 2-byte, 32 for 1-byte.
    return max(8, 32 // jnp.dtype(dtype).itemsize)


@functools.partial(jax.jit, static_argnames=("target_block_bytes",))
def aff_forward(x, alpha, beta, *, target_block_bytes=6 * 1024 * 1024):
    """x: [B, N, D]; alpha, beta: [1, 1, D]. Returns x * alpha + beta."""
    B, N, D = x.shape
    dtype = x.dtype
    itemsize = jnp.dtype(dtype).itemsize
    total = B * N * D

    # Lane-dense period: smallest multiple of D that is also a multiple of 128.
    L = (D * _LANE) // math.gcd(D, _LANE)

    if total % L == 0:
        # Free reshape to a lane-dense slab (no pad).  Element (r, c) has
        # channel index c % D (L % D == 0), so a (1, L) tiled alpha/beta
        # broadcasts correctly over every row tile.
        W, rows = L, total // L
    else:
        # Fallback: natural (B*N, D) view.  Last dim equals the full array
        # dim so the (8,128) rule is satisfied; no extra copies either.
        W, rows = D, B * N

    x2 = x.reshape(rows, W)

    reps = W // D
    a_vec = alpha.reshape(D)
    b_vec = beta.reshape(D)
    if reps > 1:
        a_vec = jnp.tile(a_vec, reps)
        b_vec = jnp.tile(b_vec, reps)
    a2 = a_vec.reshape(1, W)
    b2 = b_vec.reshape(1, W)

    # Row-tile size: as large as the ~6 MiB target allows (dtype-aware sublane
    # multiple), but capped so there are >=2 grid steps whenever possible so
    # the "parallel" axis can shard across both v7x TensorCores.
    sub = _sublane(dtype)
    tile_rows = max(sub, (target_block_bytes // (W * itemsize)) // sub * sub)
    if rows >= 2 * sub:
        cap = max(sub, (rows // 2) // sub * sub)
        tile_rows = min(tile_rows, cap)
    else:
        tile_rows = rows  # tiny input: single full-extent block.

    grid = (pl.cdiv(rows, tile_rows),)  # ragged: boundary block is masked.

    out2 = pl.pallas_call(
        _aff_kernel,
        out_shape=jax.ShapeDtypeStruct((rows, W), dtype),
        grid_spec=pl.GridSpec(
            grid=grid,
            in_specs=[
                pl.BlockSpec((1, W), lambda i: (0, 0)),          # alpha (resident)
                pl.BlockSpec((1, W), lambda i: (0, 0)),          # beta  (resident)
                pl.BlockSpec((tile_rows, W), lambda i: (i, 0)),  # x tile
            ],
            out_specs=pl.BlockSpec((tile_rows, W), lambda i: (i, 0)),
        ),
        compiler_params=pltpu.CompilerParams(
            dimension_semantics=("parallel",),
            vmem_limit_bytes=40 * 1024 * 1024,
        ),
    )(a2, b2, x2)

    return out2.reshape(B, N, D)


def _check(B, N, D, key, dtype=jnp.float32, tol=1e-6):
    k1, k2, k3 = jax.random.split(key, 3)
    # Aff.__init__ is ones/zeros; perturb so the test is non-trivial.
    alpha = (jnp.ones((1, 1, D), jnp.float32)
             + 0.1 * jax.random.normal(k1, (1, 1, D), dtype=jnp.float32))
    beta = (jnp.zeros((1, 1, D), jnp.float32)
            + 0.1 * jax.random.normal(k2, (1, 1, D), dtype=jnp.float32))
    x = jax.random.normal(k3, (B, N, D), dtype=jnp.float32).astype(dtype)

    out = jax.block_until_ready(aff_forward(x, alpha, beta))
    ref = (x.astype(jnp.float32) * alpha + beta).astype(dtype)
    assert out.shape == (B, N, D)
    assert out.dtype == dtype
    assert jnp.allclose(out.astype(jnp.float32), ref.astype(jnp.float32),
                        atol=tol, rtol=tol), f"mismatch at {(B, N, D, dtype)}"


if __name__ == "__main__":
    key = jax.random.PRNGKey(0)
    ks = jax.random.split(key, 5)

    # Small D -> lane-dense repack path (L=128, rows=4, single block).
    _check(2, 8, 32, ks[0])
    # D a multiple of 128 (typical ResMLP width), ragged rows (boundary block).
    _check(3, 7, 384, ks[1])
    # Larger token count -> multi-step parallel grid.
    _check(2, 196, 256, ks[2])
    # total % lcm(D,128) != 0 -> full-width fallback path (no pad, no copies).
    _check(1, 3, 32, ks[3])
    # bf16 I/O with f32 in-kernel math, dtype-aware sublane rounding.
    _check(2, 64, 192, ks[4], dtype=jnp.bfloat16, tol=2e-2)

    print("KERNEL_OK")
</pallas_src>

<mosaic_0001>
module attributes {stable_mosaic.version = 11 : i64} {
  func.func @_aff_kernel(%arg0: i32, %arg1: memref<1x128xf32, #tpu.memory_space<vmem>>, %arg2: memref<1x128xf32, #tpu.memory_space<vmem>>, %arg3: memref<4x128xf32, #tpu.memory_space<vmem>>, %arg4: memref<4x128xf32, #tpu.memory_space<vmem>>) attributes {dimension_semantics = [#tpu.dimension_semantics<parallel>], iteration_bounds = array<i64: 1>, scalar_prefetch = 0 : i64, scratch_operands = 0 : i64, tpu.core_type = #tpu.core_type<tc>, window_params = [{pipeline_mode = #tpu.pipeline_mode<synchronous>, transform_indices = @transform_0, window_bounds = array<i64: 1, 128>}, {pipeline_mode = #tpu.pipeline_mode<synchronous>, transform_indices = @transform_1, window_bounds = array<i64: 1, 128>}, {transform_indices = @transform_2, window_bounds = array<i64: 4, 128>}, {transform_indices = @transform_3, window_bounds = array<i64: 4, 128>}]} {
    %c0 = arith.constant 0 : index
    %c0_0 = arith.constant 0 : index
    %0 = vector.load %arg3[%c0, %c0_0] : memref<4x128xf32, #tpu.memory_space<vmem>>, vector<4x128xf32>
    %c0_1 = arith.constant 0 : index
    %c0_2 = arith.constant 0 : index
    %1 = vector.load %arg1[%c0_1, %c0_2] : memref<1x128xf32, #tpu.memory_space<vmem>>, vector<1x128xf32>
    %c0_3 = arith.constant 0 : index
    %c0_4 = arith.constant 0 : index
    %2 = vector.load %arg2[%c0_3, %c0_4] : memref<1x128xf32, #tpu.memory_space<vmem>>, vector<1x128xf32>
    %3 = vector.broadcast %1 : vector<1x128xf32> to vector<4x128xf32>
    %4 = arith.mulf %0, %3 : vector<4x128xf32>
    %5 = vector.broadcast %2 : vector<1x128xf32> to vector<4x128xf32>
    %6 = arith.addf %4, %5 : vector<4x128xf32>
    %c0_5 = arith.constant 0 : index
    %c0_6 = arith.constant 0 : index
    %7 = vector.load %arg4[%c0_5, %c0_6] : memref<4x128xf32, #tpu.memory_space<vmem>>, vector<4x128xf32>
    tpu.vector_store %arg4[%c0_5, %c0_6], %6 {strides = array<i32>} : memref<4x128xf32, #tpu.memory_space<vmem>>, vector<4x128xf32>,
    return
  }
  func.func @transform_0(%arg0: i32) -> (i32, i32) {
    %c0_i32 = arith.constant 0 : i32
    %c0_i32_0 = arith.constant 0 : i32
    %c0_i32_1 = arith.constant 0 : i32
    return %c0_i32, %c0_i32_0 : i32, i32
  }
  func.func @transform_1(%arg0: i32) -> (i32, i32) {
    %c0_i32 = arith.constant 0 : i32
    %c0_i32_0 = arith.constant 0 : i32
    %c0_i32_1 = arith.constant 0 : i32
    return %c0_i32, %c0_i32_0 : i32, i32
  }
  func.func @transform_2(%arg0: i32) -> (i32, i32) {
    %c0_i32 = arith.constant 0 : i32
    %c0_i32_0 = arith.constant 0 : i32
    return %arg0, %c0_i32 : i32, i32
  }
  func.func @transform_3(%arg0: i32) -> (i32, i32) {
    %c0_i32 = arith.constant 0 : i32
    %c0_i32_0 = arith.constant 0 : i32
    return %arg0, %c0_i32 : i32, i32
  }
}

</mosaic_0001>

<llo_original>
// kernel: tile.14
$region0: #{tile.14}
  %s0 = inlined_call_operand.vmem [shape: f32[4,32], index: 0, kind: input, shape index: {}]
  %s1 = inlined_call_operand.vmem [shape: f32[1,128], index: 1, kind: output, shape index: {}]
  $region1: #{tile.14} parent=0
    #allocation0 [shape = 'u8[4096]{0}', space=vmem, size = 0x1000, scoped, tag = 'scoped mem for output reshape']
    #allocation1 [shape = 'u8[4096]{0}', space=vmem, size = 0x1000, scoped, tag = 'scoped mem for input reshape']
    %s3 = sshllo.u32 0, 4
    %v4 = vld [vmem:[%s0] sm:%s3]
    %5 = vst [vmem:[#allocation1] sm:%s3] %v4
    %v6 = vld [vmem:[#allocation1] sm:$0x1]
    %vm7 = vcmask 261120
    %8 = vst.msk [vmem:[#allocation0] sm:$0x1] %vm7, %v6
    %s9 = scalar_lea.vmem [#allocation1], 3
    %v10 = vld [vmem:[%s9] sm:$0x1]
    %11 = vrot.lane.b32.xlu0 %v10, 96
    %v12 = vpop.permute.xlu0 %11
    %vm13 = vcmask 1048320
    %14 = vst.msk [vmem:[#allocation0] sm:$0x1] %vm13, %v12
    %s15 = scalar_lea.vmem [#allocation1], 2
    %v16 = vld [vmem:[%s15] sm:$0x1]
    %17 = vrot.lane.b32.xlu0 %v16, 64
    %v18 = vpop.permute.xlu0 %17
    %vm19 = vcmask 785920
    %20 = vst.msk [vmem:[#allocation0] sm:$0x1] %vm19, %v18
    %s21 = scalar_lea.vmem [#allocation1], 1
    %v22 = vld [vmem:[%s21] sm:$0x1]
    %23 = vrot.lane.b32.xlu0 %v22, 32
    %v24 = vpop.permute.xlu0 %23
    %vm25 = vcmask 523520
    %26 = vst.msk [vmem:[#allocation0] sm:$0x1] %vm25, %v24
    %s28 = sshllo.u32 0, 1
    %v30 = vld [vmem:[#allocation0] sm:%s28]
    %s31 = sshllo.u32 0, 1
    %32 = vst [vmem:[%s1] sm:%s31] %v30

// kernel: tile.10
$region0: #{tile.10}
  #allocation0 [shape = 's32[1]{0}', space=sflag, size = 0x4, scoped, tag = 'scoped memory for tile.10']
  %s0 = inlined_call_operand.vmem [shape: f32[32], index: 0, kind: input, shape index: {}]
  %s1 = inlined_call_operand.vmem [shape: f32[4,32], index: 1, kind: output, shape index: {}]
  // Predicated region
  $region2: #{tile.10} parent=0 // pred_check
    _
  $region3: #{tile.10} parent=0 // pred_check_branch
    %3 = sbr.rel (0) target = $region5
  $region4: #{tile.10} parent=0 // pred_region
    _
  $region5: #{tile.10} parent=0 // pred_fallthru
    _
  %v4 = vld [vmem:[%s0] ss:$0 sm:$0xff]
  %5 = vst [vmem:[%s1] sm:$0xf] %v4

// kernel: aff_forward.1
$region0: #{aff_forward.1}
  #allocation0 [shape = 'u32[]', space=smem, size = 0x4, offset = 0x4, fixed_abs, tag = 'smem constant byte address 0x4 - core index']
  #allocation1 [shape = 'u32[144,128]{1,0:T(1,128)}', space=vmem, size = 0x12000, scoped, tag = 'internal scratch']
  %s0 = inlined_call_operand.vmem [shape: f32[1,128], index: 0, kind: input, shape index: {}]
  %s1 = inlined_call_operand.vmem [shape: f32[1,128], index: 1, kind: input, shape index: {}]
  %s2 = inlined_call_operand.vmem [shape: f32[4,128], index: 2, kind: input, shape index: {}]
  %s3 = inlined_call_operand.vmem [shape: f32[4,128], index: 3, kind: output, shape index: {}]
  %s4 = sld [smem:[#allocation0]]
  $region22: #{aff_forward.1} parent=0
    _
  %s6 = ssub.s32 1, %s4
  %s7 = scalar_select 0, %s6, %s4
  // Predicated region
  $region2: #{aff_forward.1} parent=0 // pred_check
    _
  $region3: #{aff_forward.1} parent=0 // pred_check_branch
    %9 = sbr.rel (0) target = $region5
  $region4: #{aff_forward.1} parent=0 // pred_region
    _
  $region5: #{aff_forward.1} parent=0 // pred_fallthru
    _
  // Predicated region
  $region6: #{aff_forward.1} parent=0 // pred_check
    _
  $region7: #{aff_forward.1} parent=0 // pred_check_branch
    %11 = sbr.rel (0) target = $region9
  $region8: #{aff_forward.1} parent=0 // pred_region
    _
  $region9: #{aff_forward.1} parent=0 // pred_fallthru
    _
  // Predicated region
  $region10: #{aff_forward.1} parent=0 // pred_check
    _
  $region11: #{aff_forward.1} parent=0 // pred_check_branch
    %13 = sbr.rel (0) target = $region13
  $region12: #{aff_forward.1} parent=0 // pred_region
    _
  $region13: #{aff_forward.1} parent=0 // pred_fallthru
    _
  %v14 = vld [vmem:[%s2] sm:$0xf]
  %v15 = vld [vmem:[%s0] sm:$0x1]
  %v16 = vld [vmem:[%s1] sm:$0x1]
  %v18 = vlaneseq
  %v19 = vshrl.u32 %v18, 7
  %v20 = vsub.s32 0, %v19
  %v21 = vrot.slane %v15, %v20
  %v23 = vmul.f32 %v14, %v21
  %v25 = vlaneseq
  %v26 = vshrl.u32 %v25, 7
  %v27 = vsub.s32 0, %v26
  %v28 = vrot.slane %v16, %v27
  %v30 = vadd.f32 %v23, %v28
  %31 = vst [vmem:[%s3] sm:$0xf] %v30
  // Predicated region
  $region14: #{aff_forward.1} parent=0 // pred_check
    _
  $region15: #{aff_forward.1} parent=0 // pred_check_branch
    %33 = sbr.rel (0) target = $region17
  $region16: #{aff_forward.1} parent=0 // pred_region
    _
  $region17: #{aff_forward.1} parent=0 // pred_fallthru
    _
  // Predicated region
  $region18: #{aff_forward.1} parent=0 // pred_check
    _
  $region19: #{aff_forward.1} parent=0 // pred_check_branch
    %35 = sbr.rel (0) target = $region21
  $region20: #{aff_forward.1} parent=0 // pred_region
    _
  $region21: #{aff_forward.1} parent=0 // pred_fallthru
    _

</llo_original>
